<compile_context>
chip_gen: v5e
topology: v5e:2x2
jax: 0.10.0
libtpu: 0.0.40
codegen_flags: <defaults>
</compile_context>

<pallas_src>
import functools

import jax
import jax.numpy as jnp
from jax import lax
from jax.experimental import pallas as pl
from jax.experimental.pallas import tpu as pltpu


def _round_up(x, m):
    return (x + m - 1) // m * m


def _pad_gate_weight(w, H, Hp, in_pad):
    """w: (4H, In) PyTorch layout -> (in_pad, 4Hp) transposed, gate-aligned."""
    w_t = jnp.transpose(w)                       # (In, 4H)
    In = w_t.shape[0]
    cols = []
    for g in range(4):
        blk = w_t[:, g * H:(g + 1) * H]
        cols.append(jnp.pad(blk, ((0, in_pad - In), (0, Hp - H))))
    return jnp.concatenate(cols, axis=1)         # (in_pad, 4Hp)


def _pad_gate_bias(b, H, Hp):
    """b: (4H,) -> (1, 4Hp), gate-aligned."""
    segs = [jnp.pad(b[g * H:(g + 1) * H], (0, Hp - H)) for g in range(4)]
    return jnp.concatenate(segs).reshape(1, 4 * Hp)


# ---------------------------------------------------------------------------
# Kernel 1: hoisted input projection  G = X @ W_ih^T + (b_ih + b_hh)
# ---------------------------------------------------------------------------
def _input_proj_kernel(x_ref, w_ref, b_ref, g_ref):
    g_ref[...] = (
        jnp.dot(x_ref[...], w_ref[...], preferred_element_type=jnp.float32)
        + b_ref[...]
    ).astype(g_ref.dtype)


def input_projection_pallas(x, w_ih_t, bias, *, t_block):
    """x: (T_pad, Bp, Ip) f32; w_ih_t: (Ip, 4Hp) bf16; bias: (1, 4Hp) f32.
    Returns G: (T_pad, Bp, 4Hp) f32 (bias folded in)."""
    T_pad, Bp, Ip = x.shape
    G4 = w_ih_t.shape[1]
    rows = T_pad * Bp
    tm = t_block * Bp                            # one row block per time block
    x2 = x.reshape(rows, Ip).astype(jnp.bfloat16)

    g2 = pl.pallas_call(
        _input_proj_kernel,
        out_shape=jax.ShapeDtypeStruct((rows, G4), jnp.float32),
        grid_spec=pltpu.PrefetchScalarGridSpec(
            num_scalar_prefetch=0,
            grid=(rows // tm,),
            in_specs=[
                pl.BlockSpec((tm, Ip), lambda i: (i, 0)),     # X row block
                pl.BlockSpec((Ip, G4), lambda i: (0, 0)),     # W_ih^T (resident)
                pl.BlockSpec((1, G4), lambda i: (0, 0)),      # fused bias
            ],
            out_specs=pl.BlockSpec((tm, G4), lambda i: (i, 0)),
        ),
        compiler_params=pltpu.CompilerParams(
            dimension_semantics=("parallel",),
            vmem_limit_bytes=32 * 1024 * 1024),
    )(x2, w_ih_t, bias)
    return g2.reshape(T_pad, Bp, G4)


# ---------------------------------------------------------------------------
# Kernel 2: time-blocked recurrence  h_t = LSTMCell(G_t, h_{t-1}, c_{t-1})
# ---------------------------------------------------------------------------
def _lstm_recurrence_kernel(g_ref, whh_ref, h0_ref, c0_ref,
                            y_ref, hn_ref, cn_ref,
                            h_sc, c_sc, *, hidden_pad, t_block, seq_len):
    tb = pl.program_id(1)                        # time-block index (sequential)

    @pl.when(tb == 0)
    def _():
        h_sc[...] = h0_ref[...].astype(jnp.float32)
        c_sc[...] = c0_ref[...].astype(jnp.float32)

    Hp = hidden_pad
    t_divides = (seq_len % t_block) == 0         # static Python bool

    def step(s, carry):
        h_prev = h_sc[...]                       # (Bblk, Hp) f32
        c_prev = c_sc[...]                       # (Bblk, Hp) f32
        # Only the hidden-state matmul stays on the critical path (bf16 MXU,
        # f32 accumulate); the x projection + bias is already in G.
        gates = (jnp.dot(h_prev.astype(jnp.bfloat16), whh_ref[...],
                         preferred_element_type=jnp.float32)
                 + g_ref[s])                     # (Bblk, 4Hp) f32
        i_g = jax.nn.sigmoid(gates[:, 0 * Hp:1 * Hp])
        f_g = jax.nn.sigmoid(gates[:, 1 * Hp:2 * Hp])
        g_g = jnp.tanh(gates[:, 2 * Hp:3 * Hp])
        o_g = jax.nn.sigmoid(gates[:, 3 * Hp:4 * Hp])
        c_new = f_g * c_prev + i_g * g_g
        h_new = o_g * jnp.tanh(c_new)
        if not t_divides:
            # Freeze the state on padded timesteps so h_n/c_n reflect step T-1.
            valid = (tb * t_block + s) < seq_len
            c_new = jnp.where(valid, c_new, c_prev)
            h_new = jnp.where(valid, h_new, h_prev)
        c_sc[...] = c_new
        h_sc[...] = h_new
        y_ref[s] = h_new.astype(y_ref.dtype)
        return carry

    lax.fori_loop(0, t_block, step, 0, unroll=True)

    @pl.when(tb == pl.num_programs(1) - 1)
    def _():
        hn_ref[...] = h_sc[...].astype(hn_ref.dtype)
        cn_ref[...] = c_sc[...].astype(cn_ref.dtype)


def lstm_recurrence_pallas(g, w_hh_t, h0, c0, *, t_block, b_block, seq_len):
    """g: (T_pad, Bp, 4Hp) f32; w_hh_t: (Hp, 4Hp) bf16; h0/c0: (Bp, Hp) f32."""
    T_pad, Bp, G4 = g.shape
    Hp = G4 // 4
    nt = T_pad // t_block
    nb = Bp // b_block

    kernel = functools.partial(_lstm_recurrence_kernel, hidden_pad=Hp,
                               t_block=t_block, seq_len=seq_len)

    grid_spec = pltpu.PrefetchScalarGridSpec(
        num_scalar_prefetch=0,
        grid=(nb, nt),
        in_specs=[
            pl.BlockSpec((t_block, b_block, G4), lambda b, t: (t, b, 0)),  # G tile
            pl.BlockSpec((Hp, G4), lambda b, t: (0, 0)),                   # W_hh^T (resident)
            pl.BlockSpec((b_block, Hp), lambda b, t: (b, 0)),              # h0
            pl.BlockSpec((b_block, Hp), lambda b, t: (b, 0)),              # c0
        ],
        out_specs=[
            pl.BlockSpec((t_block, b_block, Hp), lambda b, t: (t, b, 0)),  # y tile
            pl.BlockSpec((b_block, Hp), lambda b, t: (b, 0)),              # h_n
            pl.BlockSpec((b_block, Hp), lambda b, t: (b, 0)),              # c_n
        ],
        scratch_shapes=[
            pltpu.VMEM((b_block, Hp), jnp.float32),                        # h carry
            pltpu.VMEM((b_block, Hp), jnp.float32),                        # c carry
        ],
    )

    y, hn, cn = pl.pallas_call(
        kernel,
        out_shape=(
            jax.ShapeDtypeStruct((T_pad, Bp, Hp), jnp.float32),
            jax.ShapeDtypeStruct((Bp, Hp), jnp.float32),
            jax.ShapeDtypeStruct((Bp, Hp), jnp.float32),
        ),
        grid_spec=grid_spec,
        compiler_params=pltpu.CompilerParams(
            dimension_semantics=("parallel", "arbitrary"),  # batch || , time sequential
            vmem_limit_bytes=32 * 1024 * 1024),
    )(g, w_hh_t, h0, c0)
    return y, hn, cn


# ---------------------------------------------------------------------------
# Model
# ---------------------------------------------------------------------------
class AWDLSTMPallas:
    """JAX/Pallas re-implementation of the PyTorch AWDLSTM forward pass."""

    def __init__(self, input_size, hidden_size, num_layers,
                 dropout=0.5, weight_dropout=0.5, embedding_size=None,
                 seed=0, t_block=4):
        self.input_size = input_size
        self.hidden_size = hidden_size
        self.num_layers = num_layers
        self.t_block = t_block          # timesteps per grid step (use 16-32 for long seqs)
        key = jax.random.PRNGKey(seed)

        if embedding_size is not None:
            key, k_emb = jax.random.split(key)
            # nn.Embedding default init: N(0, 1)
            self.embedding = jax.random.normal(
                k_emb, (input_size, embedding_size), dtype=jnp.float32)
            lstm_in = embedding_size
        else:
            self.embedding = None
            lstm_in = input_size

        H = hidden_size
        Hp = _round_up(H, 128)
        self.Hp = Hp

        # PyTorch nn.LSTM default init: U(-1/sqrt(H), 1/sqrt(H)) for all params.
        k = 1.0 / float(hidden_size) ** 0.5
        self.layers = []          # raw params (f32) for reference checks
        self.layers_padded = []   # padded / transposed / bf16 kernel params
        in_sz = lstm_in
        for _ in range(num_layers):
            key, k1, k2, k3, k4 = jax.random.split(key, 5)
            w_ih = jax.random.uniform(k1, (4 * H, in_sz),
                                      minval=-k, maxval=k, dtype=jnp.float32)
            w_hh = jax.random.uniform(k2, (4 * H, H),
                                      minval=-k, maxval=k, dtype=jnp.float32)
            b_ih = jax.random.uniform(k3, (4 * H,),
                                      minval=-k, maxval=k, dtype=jnp.float32)
            b_hh = jax.random.uniform(k4, (4 * H,),
                                      minval=-k, maxval=k, dtype=jnp.float32)
            bias = b_ih + b_hh
            self.layers.append({
                "w_ih_t": jnp.transpose(w_ih),          # (In, 4H)
                "w_hh_t": jnp.transpose(w_hh),          # (H, 4H)
                "bias": bias.reshape(1, 4 * H),
            })
            in_pad = _round_up(in_sz, 128)
            self.layers_padded.append({
                "w_ih_t": _pad_gate_weight(w_ih, H, Hp, in_pad).astype(jnp.bfloat16),
                "w_hh_t": _pad_gate_weight(w_hh, H, Hp, Hp).astype(jnp.bfloat16),
                "bias": _pad_gate_bias(bias, H, Hp),    # f32
            })
            in_sz = H

    def __call__(self, x, hidden=None):
        """x: int32 (T, B) token ids if embedding is used, else float32 (T, B, input_size)."""
        if self.embedding is not None:
            x = jnp.take(self.embedding, x, axis=0)     # (T, B, E) — glue, not hot path
        T, B, F = x.shape
        H, Hp, L = self.hidden_size, self.Hp, self.num_layers
        Tt = self.t_block
        b_block = min(_round_up(B, 8), 64)
        Bp = _round_up(B, b_block)
        T_pad = _round_up(T, Tt)

        in_pad0 = self.layers_padded[0]["w_ih_t"].shape[0]
        x_p = jnp.zeros((T_pad, Bp, in_pad0), jnp.float32)
        x_p = x_p.at[:T, :B, :F].set(x.astype(jnp.float32))

        if hidden is None:
            h0 = jnp.zeros((L, Bp, Hp), jnp.float32)
            c0 = jnp.zeros((L, Bp, Hp), jnp.float32)
        else:
            h0_u, c0_u = hidden                         # each (L, B, H)
            h0 = jnp.zeros((L, Bp, Hp), jnp.float32).at[:, :B, :H].set(h0_u)
            c0 = jnp.zeros((L, Bp, Hp), jnp.float32).at[:, :B, :H].set(c0_u)

        h_n, c_n = [], []
        layer_in = x_p
        for l, p in enumerate(self.layers_padded):
            g = input_projection_pallas(layer_in, p["w_ih_t"], p["bias"], t_block=Tt)
            y, hn, cn = lstm_recurrence_pallas(
                g, p["w_hh_t"], h0[l], c0[l],
                t_block=Tt, b_block=b_block, seq_len=T)
            h_n.append(hn[:B, :H])
            c_n.append(cn[:B, :H])
            layer_in = y        # padded (T_pad, Bp, Hp); inter-layer dropout = identity (eval)

        lstm_out = layer_in[:T, :B, :H]
        hidden_out = (jnp.stack(h_n, 0), jnp.stack(c_n, 0))   # each (L, B, H)
        # self.weight_drop(lstm_out): Dropout in eval mode == identity.
        return lstm_out, hidden_out


# ---------------------------------------------------------------------------
# Pure-JAX references for verification
# ---------------------------------------------------------------------------
def _reference_lstm(x, layers, h0, c0, hidden_size, matmul_dtype=jnp.float32):
    """Stacked-LSTM reference. matmul_dtype=bf16 mirrors the kernel's MXU precision."""
    H = hidden_size
    layer_in = x
    hns, cns = [], []
    for l, p in enumerate(layers):
        w_ih_t = p["w_ih_t"].astype(matmul_dtype)
        w_hh_t = p["w_hh_t"].astype(matmul_dtype)
        bias = p["bias"]

        def step(carry, x_t, w_ih_t=w_ih_t, w_hh_t=w_hh_t, bias=bias):
            h, c = carry
            gates = (jnp.dot(x_t.astype(matmul_dtype), w_ih_t,
                             preferred_element_type=jnp.float32)
                     + jnp.dot(h.astype(matmul_dtype), w_hh_t,
                               preferred_element_type=jnp.float32)
                     + bias)
            i = jax.nn.sigmoid(gates[:, 0 * H:1 * H])
            f = jax.nn.sigmoid(gates[:, 1 * H:2 * H])
            g = jnp.tanh(gates[:, 2 * H:3 * H])
            o = jax.nn.sigmoid(gates[:, 3 * H:4 * H])
            c_new = f * c + i * g
            h_new = o * jnp.tanh(c_new)
            return (h_new, c_new), h_new

        (hn, cn), ys = lax.scan(step, (h0[l], c0[l]), layer_in)
        hns.append(hn)
        cns.append(cn)
        layer_in = ys
    return layer_in, (jnp.stack(hns, 0), jnp.stack(cns, 0))


if __name__ == "__main__":
    # Small, deterministic configuration.
    vocab_size = 16          # input_size (vocabulary, since embedding is used)
    embedding_size = 16
    hidden_size = 32
    num_layers = 2
    seq_len = 8
    batch = 2

    model = AWDLSTMPallas(vocab_size, hidden_size, num_layers,
                          dropout=0.5, weight_dropout=0.5,
                          embedding_size=embedding_size, seed=0,
                          t_block=4)   # 2 time blocks -> exercises the VMEM state carry

    key = jax.random.PRNGKey(0)
    tokens = jax.random.randint(key, (seq_len, batch), 0, vocab_size, dtype=jnp.int32)

    out, (h_n, c_n) = model(tokens)
    out = jax.block_until_ready(out)
    h_n = jax.block_until_ready(h_n)
    c_n = jax.block_until_ready(c_n)

    assert out.shape == (seq_len, batch, hidden_size)
    assert h_n.shape == (num_layers, batch, hidden_size)
    assert c_n.shape == (num_layers, batch, hidden_size)

    x_emb = jnp.take(model.embedding, tokens, axis=0)
    h0 = jnp.zeros((num_layers, batch, hidden_size), jnp.float32)
    c0 = jnp.zeros((num_layers, batch, hidden_size), jnp.float32)

    # Reference 1: mirrors the kernel's bf16-operand / f32-accumulate matmuls (tight tol).
    ref_out, (ref_h, ref_c) = _reference_lstm(
        x_emb, model.layers, h0, c0, hidden_size, matmul_dtype=jnp.bfloat16)
    assert jnp.allclose(out, ref_out, atol=5e-3, rtol=5e-3)
    assert jnp.allclose(h_n, ref_h, atol=5e-3, rtol=5e-3)
    assert jnp.allclose(c_n, ref_c, atol=5e-3, rtol=5e-3)

    # Reference 2: pure f32 — loose tolerance bounds the bf16 weight quantization error.
    f32_out, (f32_h, f32_c) = _reference_lstm(
        x_emb, model.layers, h0, c0, hidden_size, matmul_dtype=jnp.float32)
    assert jnp.allclose(out, f32_out, atol=3e-2, rtol=3e-2)
    assert jnp.allclose(h_n, f32_h, atol=3e-2, rtol=3e-2)

    print("KERNEL_OK")
</pallas_src>

<mosaic_0001>
module attributes {stable_mosaic.version = 11 : i64} {
  func.func @_input_proj_kernel(%arg0: i32, %arg1: memref<32x128xbf16, #tpu.memory_space<vmem>>, %arg2: memref<128x512xbf16, #tpu.memory_space<vmem>>, %arg3: memref<1x512xf32, #tpu.memory_space<vmem>>, %arg4: memref<32x512xf32, #tpu.memory_space<vmem>>) attributes {dimension_semantics = [#tpu.dimension_semantics<parallel>], iteration_bounds = array<i64: 2>, scalar_prefetch = 0 : i64, scratch_operands = 0 : i64, tpu.core_type = #tpu.core_type<tc>, window_params = [{transform_indices = @transform_0, window_bounds = array<i64: 32, 128>}, {pipeline_mode = #tpu.pipeline_mode<synchronous>, transform_indices = @transform_1, window_bounds = array<i64: 128, 512>}, {pipeline_mode = #tpu.pipeline_mode<synchronous>, transform_indices = @transform_2, window_bounds = array<i64: 1, 512>}, {transform_indices = @transform_3, window_bounds = array<i64: 32, 512>}]} {
    %c0 = arith.constant 0 : index
    %c0_0 = arith.constant 0 : index
    %0 = vector.load %arg1[%c0, %c0_0] : memref<32x128xbf16, #tpu.memory_space<vmem>>, vector<32x128xbf16>
    %c0_1 = arith.constant 0 : index
    %c0_2 = arith.constant 0 : index
    %1 = vector.load %arg2[%c0_1, %c0_2] : memref<128x512xbf16, #tpu.memory_space<vmem>>, vector<128x512xbf16>
    %cst = arith.constant dense<0.000000e+00> : vector<32x512xf32>
    %2 = tpu.matmul %0, %1, %cst {dimension_numbers = #tpu.dot_dimension_numbers<[1], [0], [0], [1], [0, 0, 1, 1], [], []>} : vector<32x128xbf16>, vector<128x512xbf16>, vector<32x512xf32> -> vector<32x512xf32>
    %c0_3 = arith.constant 0 : index
    %c0_4 = arith.constant 0 : index
    %3 = vector.load %arg3[%c0_3, %c0_4] : memref<1x512xf32, #tpu.memory_space<vmem>>, vector<1x512xf32>
    %4 = vector.broadcast %3 : vector<1x512xf32> to vector<32x512xf32>
    %5 = arith.addf %2, %4 : vector<32x512xf32>
    %c0_5 = arith.constant 0 : index
    %c0_6 = arith.constant 0 : index
    %6 = vector.load %arg4[%c0_5, %c0_6] : memref<32x512xf32, #tpu.memory_space<vmem>>, vector<32x512xf32>
    tpu.vector_store %arg4[%c0_5, %c0_6], %5 {strides = array<i32>} : memref<32x512xf32, #tpu.memory_space<vmem>>, vector<32x512xf32>,
    return
  }
  func.func @transform_0(%arg0: i32) -> (i32, i32) {
    %c0_i32 = arith.constant 0 : i32
    %c0_i32_0 = arith.constant 0 : i32
    return %arg0, %c0_i32 : i32, i32
  }
  func.func @transform_1(%arg0: i32) -> (i32, i32) {
    %c0_i32 = arith.constant 0 : i32
    %c0_i32_0 = arith.constant 0 : i32
    %c0_i32_1 = arith.constant 0 : i32
    return %c0_i32, %c0_i32_0 : i32, i32
  }
  func.func @transform_2(%arg0: i32) -> (i32, i32) {
    %c0_i32 = arith.constant 0 : i32
    %c0_i32_0 = arith.constant 0 : i32
    %c0_i32_1 = arith.constant 0 : i32
    return %c0_i32, %c0_i32_0 : i32, i32
  }
  func.func @transform_3(%arg0: i32) -> (i32, i32) {
    %c0_i32 = arith.constant 0 : i32
    %c0_i32_0 = arith.constant 0 : i32
    return %arg0, %c0_i32 : i32, i32
  }
}

</mosaic_0001>

<llo_original>
// kernel: tpu_custom_call.1
$region0: #{tpu_custom_call.1}
  #allocation0 [shape = 'u32[]', space=smem, size = 0x4, offset = 0x4, fixed_abs, tag = 'smem constant byte address 0x4 - core index']
  #allocation1 [shape = 'u32[72,128]{1,0:T(1,128)}', space=vmem, size = 0x9000, scoped, tag = 'internal scratch']
  %s0 = inlined_call_operand.hbm [shape: bf16[64,128], index: 0, kind: input, shape index: {}]
  %s1 = inlined_call_operand.hbm [shape: bf16[128,512], index: 1, kind: input, shape index: {}]
  %s2 = inlined_call_operand.hbm [shape: f32[1,512], index: 2, kind: input, shape index: {}]
  %s3 = inlined_call_operand.hbm [shape: f32[64,512], index: 3, kind: output, shape index: {}]
  %s4 = sld [smem:[#allocation0]]
  $region57: #{tpu_custom_call.1} parent=0
    _
  %s6 = ssub.s32 1, %s4
  %s7 = scalar_select 0, %s6, %s4
  $region1: #{tpu_custom_call.1} parent=0
    #allocation2 [shape = 'u8[16384]{0}', space=vmem, size = 0x4000, scoped, tag = 'input window, operand 0']
    #allocation3 [shape = 's32[2]{0}', space=sflag, size = 0x8, scoped, tag = 'scoped memory for tpu_custom_call.1']
    #allocation4 [shape = 's32[2]{0}', space=sflag, size = 0x8, scoped, tag = 'scoped memory for tpu_custom_call.1']
    #allocation5 [shape = 'u8[131072]{0}', space=vmem, size = 0x20000, scoped, tag = 'input window, operand 1, single buffered']
    #allocation6 [shape = 's32[1]{0}', space=sflag, size = 0x4, scoped, tag = 'scoped memory for tpu_custom_call.1']
    #allocation7 [shape = 'u8[2048]{0}', space=vmem, size = 0x800, scoped, tag = 'input window, operand 2, single buffered']
    #allocation8 [shape = 'u8[131072]{0}', space=vmem, size = 0x20000, scoped, tag = 'output window, operand 0']
    %8 = vsyncpa [#allocation3], 0
    %s9 = scalar_lea.sflag [#allocation3], 1
    %10 = vsyncpa %s9, 0
    %11 = vsyncpa [#allocation6], 0
    %12 = vsyncpa [#allocation4], 0
    %s13 = scalar_lea.sflag [#allocation4], 1
    %14 = vsyncpa %s13, 0
    loop: start=0, step=1, limit=4
    $region2: #{tpu_custom_call.1} parent=1 // loop_pre_header
      _
    $region3: #{tpu_custom_call.1} parent=1 // loop_header
      %s16 = sphi 0, %s20
      %p17 = scmp.ge.s32.totalorder %s16, 4
      %s26 = sphi 0, %s28
      %s29 = sphi 0, %s26
      %s30 = sphi 0, %s29
      %s46 = sphi 0, %s30
      %s50 = sphi 0, %s50
      %s52 = sphi 0, %s50
      %s53 = sphi 0, %s52
      %s67 = sphi 0, %s53
      %s71 = sphi 0, %s71
      %s73 = sphi 0, %s71
      %s74 = sphi 0, %s73
      %s88 = sphi 0, %s74
      %s94 = sphi 0, %s96
      %s97 = sphi 0, %s94
      %s98 = sphi 0, %s97
      %s114 = sphi 0, %s98
    $region4: #{tpu_custom_call.1} parent=1 // loop_header_branch
      %19 = sbr.rel (%p17) target = $region8
    $region5: #{tpu_custom_call.1} parent=1 // loop_body
      %s21 = ssub.s32 %s16, 1
      %s22 = ssub.s32 %s16, 2
      %s23 = sadd.s32 %s16, 1
      %s24 = ssub.s32 %s16, %s23
      %p25 = scmp.eq.s32.totalorder %s24, 0
      %s27 = sadd.s32 %s26, 1
      %s28 = scalar_select %p25, %s26, %s27
      %p31 = pneg %p25
      %p32 = scmp.eq.s32.totalorder %s16, 1
      %p33 = por %p31, %p32
      %p34 = scmp.ne.s32.totalorder %s26, %s29
      %p35 = scmp.eq.s32.totalorder %s16, 0
      %p36 = por %p34, %p35
      %p37 = scmp.ne.s32.totalorder %s26, %s29
      %p38 = scmp.eq.s32.totalorder %s21, 1
      %p39 = por %p37, %p38
      %p40 = scmp.ne.s32.totalorder %s29, %s30
      %p41 = scmp.eq.s32.totalorder %s21, 0
      %p42 = por %p40, %p41
      %p43 = scmp.ne.s32.totalorder %s29, %s30
      %p44 = scmp.eq.s32.totalorder %s22, 1
      %p45 = por %p43, %p44
      %p47 = scmp.ne.s32.totalorder %s30, %s46
      %p48 = scmp.eq.s32.totalorder %s22, 0
      %p49 = por %p47, %p48
      %s51 = sadd.s32 %s50, 1
      %p54 = scmp.eq.s32.totalorder %s16, 1
      %p55 = scmp.ne.s32.totalorder %s50, %s52
      %p56 = scmp.eq.s32.totalorder %s16, 0
      %p57 = por %p55, %p56
      %p58 = scmp.ne.s32.totalorder %s50, %s52
      %p59 = scmp.eq.s32.totalorder %s21, 1
      %p60 = por %p58, %p59
      %p61 = scmp.ne.s32.totalorder %s52, %s53
      %p62 = scmp.eq.s32.totalorder %s21, 0
      %p63 = por %p61, %p62
      %p64 = scmp.ne.s32.totalorder %s52, %s53
      %p65 = scmp.eq.s32.totalorder %s22, 1
      %p66 = por %p64, %p65
      %p68 = scmp.ne.s32.totalorder %s53, %s67
      %p69 = scmp.eq.s32.totalorder %s22, 0
      %p70 = por %p68, %p69
      %s72 = sadd.s32 %s71, 1
      %p75 = scmp.eq.s32.totalorder %s16, 1
      %p76 = scmp.ne.s32.totalorder %s71, %s73
      %p77 = scmp.eq.s32.totalorder %s16, 0
      %p78 = por %p76, %p77
      %p79 = scmp.ne.s32.totalorder %s71, %s73
      %p80 = scmp.eq.s32.totalorder %s21, 1
      %p81 = por %p79, %p80
      %p82 = scmp.ne.s32.totalorder %s73, %s74
      %p83 = scmp.eq.s32.totalorder %s21, 0
      %p84 = por %p82, %p83
      %p85 = scmp.ne.s32.totalorder %s73, %s74
      %p86 = scmp.eq.s32.totalorder %s22, 1
      %p87 = por %p85, %p86
      %p89 = scmp.ne.s32.totalorder %s74, %s88
      %p90 = scmp.eq.s32.totalorder %s22, 0
      %p91 = por %p89, %p90
      %s92 = ssub.s32 %s16, %s23
      %p93 = scmp.eq.s32.totalorder %s92, 0
      %s95 = sadd.s32 %s94, 1
      %s96 = scalar_select %p93, %s94, %s95
      %p99 = pneg %p93
      %p100 = scmp.eq.s32.totalorder %s16, 1
      %p101 = por %p99, %p100
      %p102 = scmp.ne.s32.totalorder %s94, %s97
      %p103 = scmp.eq.s32.totalorder %s16, 0
      %p104 = por %p102, %p103
      %p105 = scmp.ne.s32.totalorder %s94, %s97
      %p106 = scmp.eq.s32.totalorder %s21, 1
      %p107 = por %p105, %p106
      %p108 = scmp.ne.s32.totalorder %s97, %s98
      %p109 = scmp.eq.s32.totalorder %s21, 0
      %p110 = por %p108, %p109
      %p111 = scmp.ne.s32.totalorder %s97, %s98
      %p112 = scmp.eq.s32.totalorder %s22, 1
      %p113 = por %p111, %p112
      %p115 = scmp.ne.s32.totalorder %s98, %s114
      %p116 = scmp.eq.s32.totalorder %s22, 0
      %p117 = por %p115, %p116
      %p118 = scmp.le.s32.totalorder 1, %s16
      %p119 = scmp.lt.s32.totalorder %s16, 3
      %p120 = pnand %p118, %p119
      %p121 = pneg %p120
      // Predicated region
      $region9: #{tpu_custom_call.1} parent=5 // pred_check
        _
      $region10: #{tpu_custom_call.1} parent=5 // pred_check_branch
        %123 = sbr.rel (%p120) target = $region12
      $region11: #{tpu_custom_call.1} parent=5 // pred_region
        %s124 = ssub.s32 %s16, 1
        // Predicated region
        $region13: #{tpu_custom_call.1} parent=11 // pred_check
          %p125 = pneg %p63
        $region14: #{tpu_custom_call.1} parent=11 // pred_check_branch
          %127 = sbr.rel (%p125) target = $region16
        $region15: #{tpu_custom_call.1} parent=11 // pred_region
          %129 = vsyncadd [#allocation6], 0
          %s130 = sshll.u32 %s1, 4
          %s131 = int_to_ptr.hbm [resolvable:$true] %s130
          %s132 = sshll.u32 [#allocation5], 4
          %s133 = int_to_ptr.vmem [resolvable:$true] %s132
          %138 = dma.hbm_to_vmem [thread:$0]  %s131, 4096, %s133, [#allocation6], 256, 256, 16
        $region16: #{tpu_custom_call.1} parent=11 // pred_fallthru
          _
        // Predicated region
        $region17: #{tpu_custom_call.1} parent=11 // pred_check
          %p139 = pneg %p84
        $region18: #{tpu_custom_call.1} parent=11 // pred_check_branch
          %141 = sbr.rel (%p139) target = $region20
        $region19: #{tpu_custom_call.1} parent=11 // pred_region
          %143 = vsyncadd [#allocation6], 0
          %s145 = sshll.u32 %s2, 4
          %s146 = int_to_ptr.hbm [resolvable:$true] %s145
          %s147 = sshll.u32 [#allocation7], 4
          %s148 = int_to_ptr.vmem [resolvable:$true] %s147
          %150 = dma.hbm_to_vmem [thread:$0]  %s146, 64, %s148, [#allocation6]
        $region20: #{tpu_custom_call.1} parent=11 // pred_fallthru
          _
      $region12: #{tpu_custom_call.1} parent=5 // pred_fallthru
        _
      %p151 = scmp.lt.s32.totalorder %s16, 2
      // Predicated region
      $region21: #{tpu_custom_call.1} parent=5 // pred_check
        %p152 = pneg %p151
      $region22: #{tpu_custom_call.1} parent=5 // pred_check_branch
        %154 = sbr.rel (%p152) target = $region24
      $region23: #{tpu_custom_call.1} parent=5 // pred_region
        // Predicated region
        $region25: #{tpu_custom_call.1} parent=23 // pred_check
          %p155 = pneg %p36
        $region26: #{tpu_custom_call.1} parent=23 // pred_check_branch
          %157 = sbr.rel (%p155) target = $region28
        $region27: #{tpu_custom_call.1} parent=23 // pred_region
          %s158 = sand.u32 %s26, 1
          %s159 = scalar_lea.sflag [#allocation3], %s158
          %s160 = sand.u32 %s26, 1
          %s161 = smul.addr %s160, 16
          %s162 = scalar_lea.vmem [#allocation2], %s161
          %s163 = smul.u32 4, %s16
          %165 = vsyncadd %s159, 0
          %s166 = smul.addr %s163, 4
          %s167 = scalar_lea.hbm %s0, %s166
          %s168 = sshll.u32 %s167, 4
          %s169 = int_to_ptr.hbm [resolvable:$true] %s168
          %s170 = sshll.u32 %s162, 4
          %s171 = int_to_ptr.vmem [resolvable:$true] %s170
          %176 = dma.hbm_to_vmem [thread:$0]  %s169, 256, %s171, %s159, 64, 64, 4
        $region28: #{tpu_custom_call.1} parent=23 // pred_fallthru
          _
      $region24: #{tpu_custom_call.1} parent=5 // pred_fallthru
        _
      %p177 = scmp.le.s32.totalorder 1, %s16
      %p178 = scmp.lt.s32.totalorder %s16, 3
      %p179 = pnand %p177, %p178
      %p180 = pneg %p179
      // Predicated region
      $region29: #{tpu_custom_call.1} parent=5 // pred_check
        _
      $region30: #{tpu_custom_call.1} parent=5 // pred_check_branch
        %182 = sbr.rel (%p179) target = $region32
      $region31: #{tpu_custom_call.1} parent=5 // pred_region
        %s183 = ssub.s32 %s16, 1
        %s184 = sand.u32 %s29, 1
        %s185 = scalar_lea.sflag [#allocation3], %s184
        %s186 = sand.u32 %s29, 1
        %s187 = smul.addr %s186, 16
        %s188 = scalar_lea.vmem [#allocation2], %s187
        // Predicated region
        $region33: #{tpu_custom_call.1} parent=31 // pred_check
          %p189 = pneg %p42
        $region34: #{tpu_custom_call.1} parent=31 // pred_check_branch
          %191 = sbr.rel (%p189) target = $region36
        $region35: #{tpu_custom_call.1} parent=31 // pred_region
          %193 = dma.done %s185, 256
        $region36: #{tpu_custom_call.1} parent=31 // pred_fallthru
          _
        // Predicated region
        $region37: #{tpu_custom_call.1} parent=31 // pred_check
          %p194 = pneg %p63
        $region38: #{tpu_custom_call.1} parent=31 // pred_check_branch
          %196 = sbr.rel (%p194) target = $region40
        $region39: #{tpu_custom_call.1} parent=31 // pred_region
          %198 = dma.done [#allocation6], 4096
        $region40: #{tpu_custom_call.1} parent=31 // pred_fallthru
          _
        // Predicated region
        $region41: #{tpu_custom_call.1} parent=31 // pred_check
          %p199 = pneg %p84
        $region42: #{tpu_custom_call.1} parent=31 // pred_check_branch
          %201 = sbr.rel (%p199) target = $region44
        $region43: #{tpu_custom_call.1} parent=31 // pred_region
          %203 = dma.done [#allocation6], 64
        $region44: #{tpu_custom_call.1} parent=31 // pred_fallthru
          _
        %s204 = sand.u32 %s29, 1
        %s205 = scalar_lea.sflag [#allocation3], %s204
        %s206 = sand.u32 %s29, 1
        %s207 = smul.addr %s206, 16
        %s208 = scalar_lea.vmem [#allocation2], %s207
        %p209 = pneg %p42
        %p210 = pneg %p39
        %p211 = pneg %p63
        %p212 = pneg %p60
        %p213 = pneg %p84
        %p214 = pneg %p81
        %p215 = pneg %p110
        %p216 = pneg %p107
        %s217 = sand.u32 %s97, 1
        %s218 = scalar_lea.sflag [#allocation4], %s217
        %s219 = sand.u32 %s97, 1
        %s220 = smul.addr %s219, 128
        %s221 = scalar_lea.vmem [#allocation8], %s220
        %s222 = smul.u32 4, %s21
        %s223 = smul.u32 4, %s21
        %v224 = vld [vmem:[%s188] sm:$0xf]
        %v225 = vld [vmem:[%s188 + $0x4] sm:$0xf]
        %v226 = vld [vmem:[%s188 + $0x8] sm:$0xf]
        %v227 = vld [vmem:[%s188 + $0xc] sm:$0xf]
        %v228 = vld [vmem:[#allocation5] sm:$0xff]
        %v229 = vld [vmem:[#allocation5 + $0x8] sm:$0xff]
        %v230 = vld [vmem:[#allocation5 + $0x10] sm:$0xff]
        %v231 = vld [vmem:[#allocation5 + $0x18] sm:$0xff]
        %v232 = vld [vmem:[#allocation5 + $0x20] sm:$0xff]
        %v233 = vld [vmem:[#allocation5 + $0x28] sm:$0xff]
        %v234 = vld [vmem:[#allocation5 + $0x30] sm:$0xff]
        %v235 = vld [vmem:[#allocation5 + $0x38] sm:$0xff]
        %v236 = vld [vmem:[#allocation5 + $0x40] sm:$0xff]
        %v237 = vld [vmem:[#allocation5 + $0x48] sm:$0xff]
        %v238 = vld [vmem:[#allocation5 + $0x50] sm:$0xff]
        %v239 = vld [vmem:[#allocation5 + $0x58] sm:$0xff]
        %v240 = vld [vmem:[#allocation5 + $0x60] sm:$0xff]
        %v241 = vld [vmem:[#allocation5 + $0x68] sm:$0xff]
        %v242 = vld [vmem:[#allocation5 + $0x70] sm:$0xff]
        %v243 = vld [vmem:[#allocation5 + $0x78] sm:$0xff]
        %v244 = vld [vmem:[#allocation5 + $0x80] sm:$0xff]
        %v245 = vld [vmem:[#allocation5 + $0x88] sm:$0xff]
        %v246 = vld [vmem:[#allocation5 + $0x90] sm:$0xff]
        %v247 = vld [vmem:[#allocation5 + $0x98] sm:$0xff]
        %v248 = vld [vmem:[#allocation5 + $0xa0] sm:$0xff]
        %v249 = vld [vmem:[#allocation5 + $0xa8] sm:$0xff]
        %v250 = vld [vmem:[#allocation5 + $0xb0] sm:$0xff]
        %v251 = vld [vmem:[#allocation5 + $0xb8] sm:$0xff]
        %v252 = vld [vmem:[#allocation5 + $0xc0] sm:$0xff]
        %v253 = vld [vmem:[#allocation5 + $0xc8] sm:$0xff]
        %v254 = vld [vmem:[#allocation5 + $0xd0] sm:$0xff]
        %v255 = vld [vmem:[#allocation5 + $0xd8] sm:$0xff]
        %v256 = vld [vmem:[#allocation5 + $0xe0] sm:$0xff]
        %v257 = vld [vmem:[#allocation5 + $0xe8] sm:$0xff]
        %v258 = vld [vmem:[#allocation5 + $0xf0] sm:$0xff]
        %v259 = vld [vmem:[#allocation5 + $0xf8] sm:$0xff]
        %v260 = vld [vmem:[#allocation7] sm:$0xf]
        %v262 = vperm.slane %v260, 0
        %v263 = vperm.slane %v260, 1
        %v264 = vperm.slane %v260, 2
        %v265 = vperm.slane %v260, 3
        %v274 = vunpack.c.l.b16 %v224
        %v275 = vunpack.c.l.b16 %v225
        %v276 = vunpack.c.l.b16 %v226
        %v277 = vunpack.c.l.b16 %v227
        %v278 = vpack.c.b16 %v275, %v274
        %v279 = vpack.c.b16 %v277, %v276
        %v314 = vunpack.c.l.b16 %v228
        %v315 = vunpack.c.h.b16 %v228
        %v316 = vunpack.c.l.b16 %v229
        %v317 = vunpack.c.h.b16 %v229
        %v318 = vunpack.c.l.b16 %v230
        %v319 = vunpack.c.h.b16 %v230
        %v320 = vunpack.c.l.b16 %v231
        %v321 = vunpack.c.h.b16 %v231
        %v322 = vunpack.c.l.b16 %v232
        %v323 = vunpack.c.h.b16 %v232
        %v324 = vunpack.c.l.b16 %v233
        %v325 = vunpack.c.h.b16 %v233
        %v326 = vunpack.c.l.b16 %v234
        %v327 = vunpack.c.h.b16 %v234
        %v328 = vunpack.c.l.b16 %v235
        %v329 = vunpack.c.h.b16 %v235
        %v330 = vunpack.c.l.b16 %v236
        %v331 = vunpack.c.h.b16 %v236
        %v332 = vunpack.c.l.b16 %v237
        %v333 = vunpack.c.h.b16 %v237
        %v334 = vunpack.c.l.b16 %v238
        %v335 = vunpack.c.h.b16 %v238
        %v336 = vunpack.c.l.b16 %v239
        %v337 = vunpack.c.h.b16 %v239
        %v338 = vunpack.c.l.b16 %v240
        %v339 = vunpack.c.h.b16 %v240
        %v340 = vunpack.c.l.b16 %v241
        %v341 = vunpack.c.h.b16 %v241
        %v342 = vunpack.c.l.b16 %v242
        %v343 = vunpack.c.h.b16 %v242
        %v344 = vunpack.c.l.b16 %v243
        %v345 = vunpack.c.h.b16 %v243
        %v346 = vunpack.c.l.b16 %v244
        %v347 = vunpack.c.h.b16 %v244
        %v348 = vunpack.c.l.b16 %v245
        %v349 = vunpack.c.h.b16 %v245
        %v350 = vunpack.c.l.b16 %v246
        %v351 = vunpack.c.h.b16 %v246
        %v352 = vunpack.c.l.b16 %v247
        %v353 = vunpack.c.h.b16 %v247
        %v354 = vunpack.c.l.b16 %v248
        %v355 = vunpack.c.h.b16 %v248
        %v356 = vunpack.c.l.b16 %v249
        %v357 = vunpack.c.h.b16 %v249
        %v358 = vunpack.c.l.b16 %v250
        %v359 = vunpack.c.h.b16 %v250
        %v360 = vunpack.c.l.b16 %v251
        %v361 = vunpack.c.h.b16 %v251
        %v362 = vunpack.c.l.b16 %v252
        %v363 = vunpack.c.h.b16 %v252
        %v364 = vunpack.c.l.b16 %v253
        %v365 = vunpack.c.h.b16 %v253
        %v366 = vunpack.c.l.b16 %v254
        %v367 = vunpack.c.h.b16 %v254
        %v368 = vunpack.c.l.b16 %v255
        %v369 = vunpack.c.h.b16 %v255
        %v370 = vunpack.c.l.b16 %v256
        %v371 = vunpack.c.h.b16 %v256
        %v372 = vunpack.c.l.b16 %v257
        %v373 = vunpack.c.h.b16 %v257
        %v374 = vunpack.c.l.b16 %v258
        %v375 = vunpack.c.h.b16 %v258
        %v376 = vunpack.c.l.b16 %v259
        %v377 = vunpack.c.h.b16 %v259
        %v378 = vpack.c.b16 %v318, %v314
        %v379 = vpack.c.b16 %v319, %v315
        %v380 = vpack.c.b16 %v320, %v316
        %v381 = vpack.c.b16 %v321, %v317
        %v382 = vpack.c.b16 %v326, %v322
        %v383 = vpack.c.b16 %v327, %v323
        %v384 = vpack.c.b16 %v328, %v324
        %v385 = vpack.c.b16 %v329, %v325
        %v386 = vpack.c.b16 %v334, %v330
        %v387 = vpack.c.b16 %v335, %v331
        %v388 = vpack.c.b16 %v336, %v332
        %v389 = vpack.c.b16 %v337, %v333
        %v390 = vpack.c.b16 %v342, %v338
        %v391 = vpack.c.b16 %v343, %v339
        %v392 = vpack.c.b16 %v344, %v340
        %v393 = vpack.c.b16 %v345, %v341
        %v394 = vpack.c.b16 %v350, %v346
        %v395 = vpack.c.b16 %v351, %v347
        %v396 = vpack.c.b16 %v352, %v348
        %v397 = vpack.c.b16 %v353, %v349
        %v398 = vpack.c.b16 %v358, %v354
        %v399 = vpack.c.b16 %v359, %v355
        %v400 = vpack.c.b16 %v360, %v356
        %v401 = vpack.c.b16 %v361, %v357
        %v402 = vpack.c.b16 %v366, %v362
        %v403 = vpack.c.b16 %v367, %v363
        %v404 = vpack.c.b16 %v368, %v364
        %v405 = vpack.c.b16 %v369, %v365
        %v406 = vpack.c.b16 %v374, %v370
        %v407 = vpack.c.b16 %v375, %v371
        %v408 = vpack.c.b16 %v376, %v372
        %v409 = vpack.c.b16 %v377, %v373
        %442 = vmatpush.bf16.msra.mxu0 %v406
        %443 = vmatpush.bf16.msra.mxu0 %v402
        %444 = vmatpush.bf16.msra.mxu0 %v398
        %445 = vmatpush.bf16.msra.mxu0 %v394
        %446 = vmatpush.bf16.msra.mxu0 %v390
        %447 = vmatpush.bf16.msra.mxu0 %v386
        %448 = vmatpush.bf16.msra.mxu0 %v382
        %449 = vmatpush.bf16.msra.mxu0 %v378
        %450 = vmatmul.bf16.gmra.mxu0 %v278
        %v451 = vpop.f32.mrf.mxu0
        %v452 = vadd.f32 %v262, %v451
        %v453 = vpop.f32.mrf.mxu0
        %v454 = vadd.f32 %v262, %v453
        %455 = vmatmul.bf16.gmra.mxu0 %v279
        %v456 = vpop.f32.mrf.mxu0
        %v457 = vadd.f32 %v262, %v456
        %v458 = vpop.f32.mrf.mxu0
        %v459 = vadd.f32 %v262, %v458
        %460 = vdwg.mxu0
        %461 = vmatpush.bf16.msra.mxu0 %v407
        %462 = vmatpush.bf16.msra.mxu0 %v403
        %463 = vmatpush.bf16.msra.mxu0 %v399
        %464 = vmatpush.bf16.msra.mxu0 %v395
        %465 = vmatpush.bf16.msra.mxu0 %v391
        %466 = vmatpush.bf16.msra.mxu0 %v387
        %467 = vmatpush.bf16.msra.mxu0 %v383
        %468 = vmatpush.bf16.msra.mxu0 %v379
        %469 = vmatmul.bf16.gmra.mxu0 %v278
        %v470 = vpop.f32.mrf.mxu0
        %v471 = vadd.f32 %v263, %v470
        %v472 = vpop.f32.mrf.mxu0
        %v473 = vadd.f32 %v263, %v472
        %474 = vmatmul.bf16.gmra.mxu0 %v279
        %v475 = vpop.f32.mrf.mxu0
        %v476 = vadd.f32 %v263, %v475
        %v477 = vpop.f32.mrf.mxu0
        %v478 = vadd.f32 %v263, %v477
        %479 = vdwg.mxu0
        %480 = vmatpush.bf16.msra.mxu0 %v408
        %481 = vmatpush.bf16.msra.mxu0 %v404
        %482 = vmatpush.bf16.msra.mxu0 %v400
        %483 = vmatpush.bf16.msra.mxu0 %v396
        %484 = vmatpush.bf16.msra.mxu0 %v392
        %485 = vmatpush.bf16.msra.mxu0 %v388
        %486 = vmatpush.bf16.msra.mxu0 %v384
        %487 = vmatpush.bf16.msra.mxu0 %v380
        %488 = vmatmul.bf16.gmra.mxu0 %v278
        %v489 = vpop.f32.mrf.mxu0
        %v490 = vadd.f32 %v264, %v489
        %v491 = vpop.f32.mrf.mxu0
        %v492 = vadd.f32 %v264, %v491
        %493 = vmatmul.bf16.gmra.mxu0 %v279
        %v494 = vpop.f32.mrf.mxu0
        %v495 = vadd.f32 %v264, %v494
        %v496 = vpop.f32.mrf.mxu0
        %v497 = vadd.f32 %v264, %v496
        %498 = vdwg.mxu0
        %499 = vmatpush.bf16.msra.mxu0 %v409
        %500 = vmatpush.bf16.msra.mxu0 %v405
        %501 = vmatpush.bf16.msra.mxu0 %v401
        %502 = vmatpush.bf16.msra.mxu0 %v397
        %503 = vmatpush.bf16.msra.mxu0 %v393
        %504 = vmatpush.bf16.msra.mxu0 %v389
        %505 = vmatpush.bf16.msra.mxu0 %v385
        %506 = vmatpush.bf16.msra.mxu0 %v381
        %507 = vmatmul.bf16.gmra.mxu0 %v278
        %v508 = vpop.f32.mrf.mxu0
        %v509 = vadd.f32 %v265, %v508
        %v510 = vpop.f32.mrf.mxu0
        %v511 = vadd.f32 %v265, %v510
        %512 = vmatmul.bf16.gmra.mxu0 %v279
        %v513 = vpop.f32.mrf.mxu0
        %v514 = vadd.f32 %v265, %v513
        %v515 = vpop.f32.mrf.mxu0
        %v516 = vadd.f32 %v265, %v515
        %517 = vdwg.mxu0
        %518 = vst [vmem:[%s221] sm:$0xff] %v452
        %519 = vst [vmem:[%s221 + $0x8] sm:$0xff] %v471
        %520 = vst [vmem:[%s221 + $0x10] sm:$0xff] %v490
        %521 = vst [vmem:[%s221 + $0x18] sm:$0xff] %v509
        %522 = vst [vmem:[%s221 + $0x20] sm:$0xff] %v454
        %523 = vst [vmem:[%s221 + $0x28] sm:$0xff] %v473
        %524 = vst [vmem:[%s221 + $0x30] sm:$0xff] %v492
        %525 = vst [vmem:[%s221 + $0x38] sm:$0xff] %v511
        %526 = vst [vmem:[%s221 + $0x40] sm:$0xff] %v457
        %527 = vst [vmem:[%s221 + $0x48] sm:$0xff] %v476
        %528 = vst [vmem:[%s221 + $0x50] sm:$0xff] %v495
        %529 = vst [vmem:[%s221 + $0x58] sm:$0xff] %v514
        %530 = vst [vmem:[%s221 + $0x60] sm:$0xff] %v459
        %531 = vst [vmem:[%s221 + $0x68] sm:$0xff] %v478
        %532 = vst [vmem:[%s221 + $0x70] sm:$0xff] %v497
        %533 = vst [vmem:[%s221 + $0x78] sm:$0xff] %v516
        %s534 = sand.u32 %s97, 1
        %s535 = scalar_lea.sflag [#allocation4], %s534
        %s536 = sand.u32 %s97, 1
        %s537 = smul.addr %s536, 128
        %s538 = scalar_lea.vmem [#allocation8], %s537
        // Predicated region
        $region45: #{tpu_custom_call.1} parent=31 // pred_check
          %p539 = pneg %p107
        $region46: #{tpu_custom_call.1} parent=31 // pred_check_branch
          %541 = sbr.rel (%p539) target = $region48
        $region47: #{tpu_custom_call.1} parent=31 // pred_region
          %s542 = smul.u32 4, %s21
          %544 = vsyncadd %s535, 0
          %s545 = smul.addr %s542, 4
          %s546 = smul.addr %s545, 8
          %s547 = scalar_lea.hbm %s3, %s546
          %s548 = sshll.u32 %s538, 4
          %s549 = int_to_ptr.vmem [resolvable:$true] %s548
          %s550 = sshll.u32 %s547, 4
          %s551 = int_to_ptr.hbm [resolvable:$true] %s550
          %556 = dma.vmem_to_hbm [thread:$0]  %s549, 2048, %s551, %s535, 512, 512, 32
        $region48: #{tpu_custom_call.1} parent=31 // pred_fallthru
          _
      $region32: #{tpu_custom_call.1} parent=5 // pred_fallthru
        _
      %p557 = scmp.le.s32.totalorder 2, %s16
      // Predicated region
      $region49: #{tpu_custom_call.1} parent=5 // pred_check
        %p558 = pneg %p557
      $region50: #{tpu_custom_call.1} parent=5 // pred_check_branch
        %560 = sbr.rel (%p558) target = $region52
      $region51: #{tpu_custom_call.1} parent=5 // pred_region
        %s561 = ssub.s32 %s16, 2
        // Predicated region
        $region53: #{tpu_custom_call.1} parent=51 // pred_check
          %p562 = pneg %p113
        $region54: #{tpu_custom_call.1} parent=51 // pred_check_branch
          %564 = sbr.rel (%p562) target = $region56
        $region55: #{tpu_custom_call.1} parent=51 // pred_region
          %s565 = sand.u32 %s98, 1
          %s566 = scalar_lea.sflag [#allocation4], %s565
          %s567 = sand.u32 %s98, 1
          %s568 = smul.addr %s567, 128
          %s569 = scalar_lea.vmem [#allocation8], %s568
          %571 = dma.done %s566, 2048
        $region56: #{tpu_custom_call.1} parent=51 // pred_fallthru
          _
      $region52: #{tpu_custom_call.1} parent=5 // pred_fallthru
        _
    $region6: #{tpu_custom_call.1} parent=1 // loop_footer
      %s20 = sadd.s32 1, %s16
    $region7: #{tpu_custom_call.1} parent=1 // loop_footer_branch
      %15 = sbr.rel target = $region3
    $region8: #{tpu_custom_call.1} parent=1 // loop_exit
      _
    %572 = vsyncpa [#allocation3], 1
    %s573 = scalar_lea.sflag [#allocation3], 1
    %574 = vsyncpa %s573, 1
    %575 = vsyncpa [#allocation6], 1
    %576 = vsyncpa [#allocation4], 1
    %s577 = scalar_lea.sflag [#allocation4], 1
    %578 = vsyncpa %s577, 1

</llo_original>
